<compile_context>
chip_gen: v7x
topology: tpu7x:2x2x1
jax: 0.10.0
libtpu: 0.0.40
codegen_flags: <defaults>
</compile_context>

<pallas_src>
import jax
import jax.numpy as jnp
from jax import lax
from jax.experimental import pallas as pl
from jax.experimental.pallas import tpu as pltpu


# ----------------------------------------------------------------------------
# Fused multi-head GATConv kernel (all heads in one invocation)
# ----------------------------------------------------------------------------
def make_gat_conv_kernel(num_heads, head_dim, *, apply_elu, fuse_pool):
    H, C = num_heads, head_dim
    HC = H * C
    dn = (((1,), (1,)), ((), ()))  # contract last dims of both operands

    def kernel(*refs):
        if fuse_pool:
            x_ref, adj_ref, w_ref, psrc_ref, b_ref, pool_ref, o_ref = refs
        else:
            x_ref, adj_ref, w_ref, psrc_ref, b_ref, o_ref = refs

        # One bf16 MXU matmul produces [h_all | alpha_dst] for every head.
        z = jnp.dot(x_ref[...].astype(jnp.bfloat16),
                    w_ref[...].astype(jnp.bfloat16),
                    preferred_element_type=jnp.float32)          # [N, HC+H]
        h = z[:, :HC]                                            # [N, HC]
        a_dst = z[:, HC:HC + H]                                  # [N, H]

        # alpha_src rows for all heads in one small matmul -> [H, N].
        a_src = lax.dot_general(psrc_ref[...].astype(jnp.bfloat16),
                                h.astype(jnp.bfloat16), dn,
                                preferred_element_type=jnp.float32)

        edge_mask = adj_ref[...] != 0                            # int8 -> bool
        neg_big = jnp.float32(-1e30)
        h_b = h.astype(jnp.bfloat16)

        outs = []
        for hh in range(H):                                      # static unroll
            # e[i, j] = alpha_dst[i] + alpha_src[j]
            e = a_dst[:, hh:hh + 1] + a_src[hh:hh + 1, :]        # [N, N]
            e = jnp.where(e > 0, e, 0.2 * e)                     # leaky_relu
            logits = jnp.where(edge_mask, e, neg_big)
            m = jnp.max(logits, axis=-1, keepdims=True)
            p = jnp.exp(logits - m)
            denom = jnp.sum(p, axis=-1, keepdims=True)
            attn = p * pl.reciprocal(denom, approx=True)         # EUP divide
            outs.append(jnp.dot(attn.astype(jnp.bfloat16),
                                h_b[:, hh * C:(hh + 1) * C],
                                preferred_element_type=jnp.float32))

        out = outs[0] if H == 1 else jnp.concatenate(outs, axis=-1)
        out = out + b_ref[...]                                   # [N, HC]

        if apply_elu:                                            # fused ELU
            out = jnp.where(out > 0, out, jnp.exp(out) - 1.0)
        if fuse_pool:                                            # fused pool
            out = jnp.dot(pool_ref[...], out,
                          preferred_element_type=jnp.float32)    # [B, HC]
        o_ref[...] = out

    return kernel


def gat_conv(x, adj, w_main, proj_src, bias_row, *, num_heads, head_dim,
             apply_elu=False, pool_mat=None):
    """Fused dense GATConv (+ optional ELU epilogue and mean-pool epilogue)."""
    N = x.shape[0]
    HC = num_heads * head_dim
    fuse_pool = pool_mat is not None
    kernel = make_gat_conv_kernel(num_heads, head_dim,
                                  apply_elu=apply_elu, fuse_pool=fuse_pool)
    args = [x, adj, w_main, proj_src, bias_row]
    out_rows = N
    if fuse_pool:
        args.append(pool_mat)
        out_rows = pool_mat.shape[0]
    vmem = pl.BlockSpec(memory_space=pltpu.MemorySpace.VMEM)
    return pl.pallas_call(
        kernel,
        out_shape=jax.ShapeDtypeStruct((out_rows, HC), jnp.float32),
        in_specs=[vmem] * len(args),
        out_specs=vmem,
    )(*args)


# ----------------------------------------------------------------------------
# Parameter packing (done once, outside the kernels)
# ----------------------------------------------------------------------------
def prepare_conv_params(w, att_src, att_dst, bias):
    """w: [H, Fin, C]; att_src/att_dst/bias: [H, 1, C].

    Returns:
      w_main   [Fin, H*C + H]  -- per-head weights packed on lanes, with the
                                  alpha_dst projections folded in as columns.
      proj_src [H, H*C]        -- block-diagonal att_src projection.
      bias_row [1, H*C]        -- concatenated per-head bias.
    """
    H, Fin, C = w.shape
    w_all = jnp.transpose(w, (1, 0, 2)).reshape(Fin, H * C)
    w_dst = jnp.einsum("hfc,hc->fh", w, att_dst[:, 0, :])        # [Fin, H]
    w_main = jnp.concatenate([w_all, w_dst], axis=1)
    proj_src = jnp.einsum("hc,hg->hgc", att_src[:, 0, :],
                          jnp.eye(H, dtype=w.dtype)).reshape(H, H * C)
    bias_row = bias[:, 0, :].reshape(1, H * C)
    return w_main, proj_src, bias_row


# ----------------------------------------------------------------------------
# Full GAT forward
# ----------------------------------------------------------------------------
def gat_forward(x, edge_index, batch, params, *, num_graphs):
    N = x.shape[0]
    # Dense adjacency (adj[dst, src] = 1) with self loops, int8 to cut DMA.
    adj = jnp.zeros((N, N), jnp.int8).at[edge_index[1], edge_index[0]].set(1)
    adj = jnp.maximum(adj, jnp.eye(N, dtype=jnp.int8))

    # Mean-pool matrix [num_graphs, N]; guard against empty graphs.
    onehot = (batch[None, :] == jnp.arange(num_graphs)[:, None]).astype(jnp.float32)
    counts = jnp.maximum(jnp.sum(onehot, axis=1, keepdims=True), 1.0)
    pool_mat = onehot / counts

    H1, _, C1 = params["w1"].shape
    H2, _, C2 = params["w2"].shape

    w1m, p1s, b1r = prepare_conv_params(params["w1"], params["as1"],
                                        params["ad1"], params["b1"])
    w2m, p2s, b2r = prepare_conv_params(params["w2"], params["as2"],
                                        params["ad2"], params["b2"])

    # Dropout(p=0.6) is identity at inference.
    h1 = gat_conv(x, adj, w1m, p1s, b1r, num_heads=H1, head_dim=C1,
                  apply_elu=True)                        # [N, H1*C1], ELU fused
    out = gat_conv(h1, adj, w2m, p2s, b2r, num_heads=H2, head_dim=C2,
                   apply_elu=False, pool_mat=pool_mat)   # [B, C2], pool fused
    return out


# ----------------------------------------------------------------------------
# Main
# ----------------------------------------------------------------------------
if __name__ == "__main__":
    key = jax.random.PRNGKey(0)
    ks = jax.random.split(key, 12)

    # Small shapes consistent with the module.
    N, B = 16, 2                       # 2 graphs of 8 nodes each
    in_ch, hid, out_ch, heads = 8, 8, 4, 4

    # Node features.
    x = jax.random.normal(ks[0], (N, in_ch), jnp.float32)

    # Edges: bidirectional ring within each graph.
    src, dst = [], []
    for g in range(B):
        base = g * 8
        for i in range(8):
            a, b_ = base + i, base + (i + 1) % 8
            src += [a, b_]
            dst += [b_, a]
    edge_index = jnp.array([src, dst], dtype=jnp.int32)             # [2, E]
    batch = jnp.array([0] * 8 + [1] * 8, dtype=jnp.int32)           # [N]

    # Deterministic parameters (shapes follow GATConv's __init__).
    params = {
        # conv1: GATConv(in_ch, hid, heads=4)
        "w1":  jax.random.normal(ks[1], (heads, in_ch, hid), jnp.float32) * 0.2,
        "as1": jax.random.normal(ks[2], (heads, 1, hid), jnp.float32) * 0.2,
        "ad1": jax.random.normal(ks[3], (heads, 1, hid), jnp.float32) * 0.2,
        "b1":  jax.random.normal(ks[4], (heads, 1, hid), jnp.float32) * 0.1,
        # conv2: GATConv(heads*hid, out_ch, heads=1, concat=False)
        "w2":  jax.random.normal(ks[5], (1, heads * hid, out_ch), jnp.float32) * 0.2,
        "as2": jax.random.normal(ks[6], (1, 1, out_ch), jnp.float32) * 0.2,
        "ad2": jax.random.normal(ks[7], (1, 1, out_ch), jnp.float32) * 0.2,
        "b2":  jax.random.normal(ks[8], (1, 1, out_ch), jnp.float32) * 0.1,
    }

    out = gat_forward(x, edge_index, batch, params, num_graphs=B)
    out = jax.block_until_ready(out)
    assert out.shape == (B, out_ch)
    assert bool(jnp.all(jnp.isfinite(out)))
    print("KERNEL_OK")
</pallas_src>

<mosaic_0001>
module attributes {stable_mosaic.version = 11 : i64} {
  func.func @kernel(%arg0: memref<16x8xf32, #tpu.memory_space<vmem>>, %arg1: memref<16x16xi8, #tpu.memory_space<vmem>>, %arg2: memref<8x36xf32, #tpu.memory_space<vmem>>, %arg3: memref<4x32xf32, #tpu.memory_space<vmem>>, %arg4: memref<1x32xf32, #tpu.memory_space<vmem>>, %arg5: memref<16x32xf32, #tpu.memory_space<vmem>>) attributes {dimension_semantics = [], scalar_prefetch = 0 : i64, scratch_operands = 0 : i64, tpu.core_type = #tpu.core_type<tc>} {
    %c0 = arith.constant 0 : index
    %c0_0 = arith.constant 0 : index
    %0 = vector.load %arg0[%c0, %c0_0] : memref<16x8xf32, #tpu.memory_space<vmem>>, vector<16x8xf32>
    %1 = arith.truncf %0 : vector<16x8xf32> to vector<16x8xbf16>
    %c0_1 = arith.constant 0 : index
    %c0_2 = arith.constant 0 : index
    %2 = vector.load %arg2[%c0_1, %c0_2] : memref<8x36xf32, #tpu.memory_space<vmem>>, vector<8x36xf32>
    %3 = arith.truncf %2 : vector<8x36xf32> to vector<8x36xbf16>
    %cst = arith.constant dense<0.000000e+00> : vector<16x36xf32>
    %4 = tpu.matmul %1, %3, %cst {dimension_numbers = #tpu.dot_dimension_numbers<[1], [0], [0], [1], [0, 0, 1, 1], [], []>} : vector<16x8xbf16>, vector<8x36xbf16>, vector<16x36xf32> -> vector<16x36xf32>
    %5 = vector.extract_strided_slice %4 {offsets = [0, 0], sizes = [16, 32], strides = [1, 1]} : vector<16x36xf32> to vector<16x32xf32>
    %6 = vector.extract_strided_slice %4 {offsets = [0, 32], sizes = [16, 4], strides = [1, 1]} : vector<16x36xf32> to vector<16x4xf32>
    %c0_3 = arith.constant 0 : index
    %c0_4 = arith.constant 0 : index
    %7 = vector.load %arg3[%c0_3, %c0_4] : memref<4x32xf32, #tpu.memory_space<vmem>>, vector<4x32xf32>
    %8 = arith.truncf %7 : vector<4x32xf32> to vector<4x32xbf16>
    %9 = arith.truncf %5 : vector<16x32xf32> to vector<16x32xbf16>
    %cst_5 = arith.constant dense<0.000000e+00> : vector<4x16xf32>
    %10 = tpu.matmul %8, %9, %cst_5 {dimension_numbers = #tpu.dot_dimension_numbers<[1], [1], [0], [0], [0, 0, 1, 0], [], []>} : vector<4x32xbf16>, vector<16x32xbf16>, vector<4x16xf32> -> vector<4x16xf32>
    %c0_6 = arith.constant 0 : index
    %c0_7 = arith.constant 0 : index
    %11 = vector.load %arg1[%c0_6, %c0_7] : memref<16x16xi8, #tpu.memory_space<vmem>>, vector<16x16xi8>
    %c0_i8 = arith.constant 0 : i8
    %12 = vector.broadcast %c0_i8 : i8 to vector<16x16xi8>
    %13 = arith.cmpi ne, %11, %12 : vector<16x16xi8>
    %14 = arith.truncf %5 : vector<16x32xf32> to vector<16x32xbf16>
    %15 = vector.extract_strided_slice %6 {offsets = [0, 0], sizes = [16, 1], strides = [1, 1]} : vector<16x4xf32> to vector<16x1xf32>
    %16 = vector.extract_strided_slice %10 {offsets = [0, 0], sizes = [1, 16], strides = [1, 1]} : vector<4x16xf32> to vector<1x16xf32>
    %17 = vector.broadcast %15 : vector<16x1xf32> to vector<16x16xf32>
    %18 = vector.broadcast %16 : vector<1x16xf32> to vector<16x16xf32>
    %19 = arith.addf %17, %18 : vector<16x16xf32>
    %cst_8 = arith.constant 0.000000e+00 : f32
    %20 = vector.broadcast %cst_8 : f32 to vector<16x16xf32>
    %21 = arith.cmpf ogt, %19, %20 : vector<16x16xf32>
    %cst_9 = arith.constant 2.000000e-01 : f32
    %22 = vector.broadcast %cst_9 : f32 to vector<16x16xf32>
    %23 = arith.mulf %22, %19 : vector<16x16xf32>
    %24 = arith.select %21, %19, %23 : vector<16x16xi1>, vector<16x16xf32>
    %cst_10 = arith.constant -1.000000e+30 : f32
    %25 = vector.broadcast %cst_10 : f32 to vector<16x16xf32>
    %26 = arith.select %13, %24, %25 : vector<16x16xi1>, vector<16x16xf32>
    %cst_11 = arith.constant dense<0xFF800000> : vector<16xf32>
    %27 = vector.multi_reduction <maximumf>, %26, %cst_11 [1] : vector<16x16xf32> to vector<16xf32>
    %28 = vector.shape_cast %27 : vector<16xf32> to vector<16x1xf32>
    %29 = vector.broadcast %28 : vector<16x1xf32> to vector<16x16xf32>
    %30 = arith.subf %26, %29 : vector<16x16xf32>
    %31 = math.exp %30 : vector<16x16xf32>
    %cst_12 = arith.constant dense<0.000000e+00> : vector<16xf32>
    %32 = vector.multi_reduction <add>, %31, %cst_12 [1] : vector<16x16xf32> to vector<16xf32>
    %33 = vector.shape_cast %32 : vector<16xf32> to vector<16x1xf32>
    %34 = tpu.reciprocal %33 {approx = true} : vector<16x1xf32> -> vector<16x1xf32>
    %35 = vector.broadcast %34 : vector<16x1xf32> to vector<16x16xf32>
    %36 = arith.mulf %31, %35 : vector<16x16xf32>
    %37 = arith.truncf %36 : vector<16x16xf32> to vector<16x16xbf16>
    %38 = vector.extract_strided_slice %14 {offsets = [0, 0], sizes = [16, 8], strides = [1, 1]} : vector<16x32xbf16> to vector<16x8xbf16>
    %cst_13 = arith.constant dense<0.000000e+00> : vector<16x8xf32>
    %39 = tpu.matmul %37, %38, %cst_13 {dimension_numbers = #tpu.dot_dimension_numbers<[1], [0], [0], [1], [0, 0, 1, 1], [], []>} : vector<16x16xbf16>, vector<16x8xbf16>, vector<16x8xf32> -> vector<16x8xf32>
    %40 = vector.extract_strided_slice %6 {offsets = [0, 1], sizes = [16, 1], strides = [1, 1]} : vector<16x4xf32> to vector<16x1xf32>
    %41 = vector.extract_strided_slice %10 {offsets = [1, 0], sizes = [1, 16], strides = [1, 1]} : vector<4x16xf32> to vector<1x16xf32>
    %42 = vector.broadcast %40 : vector<16x1xf32> to vector<16x16xf32>
    %43 = vector.broadcast %41 : vector<1x16xf32> to vector<16x16xf32>
    %44 = arith.addf %42, %43 : vector<16x16xf32>
    %cst_14 = arith.constant 0.000000e+00 : f32
    %45 = vector.broadcast %cst_14 : f32 to vector<16x16xf32>
    %46 = arith.cmpf ogt, %44, %45 : vector<16x16xf32>
    %cst_15 = arith.constant 2.000000e-01 : f32
    %47 = vector.broadcast %cst_15 : f32 to vector<16x16xf32>
    %48 = arith.mulf %47, %44 : vector<16x16xf32>
    %49 = arith.select %46, %44, %48 : vector<16x16xi1>, vector<16x16xf32>
    %cst_16 = arith.constant -1.000000e+30 : f32
    %50 = vector.broadcast %cst_16 : f32 to vector<16x16xf32>
    %51 = arith.select %13, %49, %50 : vector<16x16xi1>, vector<16x16xf32>
    %cst_17 = arith.constant dense<0xFF800000> : vector<16xf32>
    %52 = vector.multi_reduction <maximumf>, %51, %cst_17 [1] : vector<16x16xf32> to vector<16xf32>
    %53 = vector.shape_cast %52 : vector<16xf32> to vector<16x1xf32>
    %54 = vector.broadcast %53 : vector<16x1xf32> to vector<16x16xf32>
    %55 = arith.subf %51, %54 : vector<16x16xf32>
    %56 = math.exp %55 : vector<16x16xf32>
    %cst_18 = arith.constant dense<0.000000e+00> : vector<16xf32>
    %57 = vector.multi_reduction <add>, %56, %cst_18 [1] : vector<16x16xf32> to vector<16xf32>
    %58 = vector.shape_cast %57 : vector<16xf32> to vector<16x1xf32>
    %59 = tpu.reciprocal %58 {approx = true} : vector<16x1xf32> -> vector<16x1xf32>
    %60 = vector.broadcast %59 : vector<16x1xf32> to vector<16x16xf32>
    %61 = arith.mulf %56, %60 : vector<16x16xf32>
    %62 = arith.truncf %61 : vector<16x16xf32> to vector<16x16xbf16>
    %63 = vector.extract_strided_slice %14 {offsets = [0, 8], sizes = [16, 8], strides = [1, 1]} : vector<16x32xbf16> to vector<16x8xbf16>
    %cst_19 = arith.constant dense<0.000000e+00> : vector<16x8xf32>
    %64 = tpu.matmul %62, %63, %cst_19 {dimension_numbers = #tpu.dot_dimension_numbers<[1], [0], [0], [1], [0, 0, 1, 1], [], []>} : vector<16x16xbf16>, vector<16x8xbf16>, vector<16x8xf32> -> vector<16x8xf32>
    %65 = vector.extract_strided_slice %6 {offsets = [0, 2], sizes = [16, 1], strides = [1, 1]} : vector<16x4xf32> to vector<16x1xf32>
    %66 = vector.extract_strided_slice %10 {offsets = [2, 0], sizes = [1, 16], strides = [1, 1]} : vector<4x16xf32> to vector<1x16xf32>
    %67 = vector.broadcast %65 : vector<16x1xf32> to vector<16x16xf32>
    %68 = vector.broadcast %66 : vector<1x16xf32> to vector<16x16xf32>
    %69 = arith.addf %67, %68 : vector<16x16xf32>
    %cst_20 = arith.constant 0.000000e+00 : f32
    %70 = vector.broadcast %cst_20 : f32 to vector<16x16xf32>
    %71 = arith.cmpf ogt, %69, %70 : vector<16x16xf32>
    %cst_21 = arith.constant 2.000000e-01 : f32
    %72 = vector.broadcast %cst_21 : f32 to vector<16x16xf32>
    %73 = arith.mulf %72, %69 : vector<16x16xf32>
    %74 = arith.select %71, %69, %73 : vector<16x16xi1>, vector<16x16xf32>
    %cst_22 = arith.constant -1.000000e+30 : f32
    %75 = vector.broadcast %cst_22 : f32 to vector<16x16xf32>
    %76 = arith.select %13, %74, %75 : vector<16x16xi1>, vector<16x16xf32>
    %cst_23 = arith.constant dense<0xFF800000> : vector<16xf32>
    %77 = vector.multi_reduction <maximumf>, %76, %cst_23 [1] : vector<16x16xf32> to vector<16xf32>
    %78 = vector.shape_cast %77 : vector<16xf32> to vector<16x1xf32>
    %79 = vector.broadcast %78 : vector<16x1xf32> to vector<16x16xf32>
    %80 = arith.subf %76, %79 : vector<16x16xf32>
    %81 = math.exp %80 : vector<16x16xf32>
    %cst_24 = arith.constant dense<0.000000e+00> : vector<16xf32>
    %82 = vector.multi_reduction <add>, %81, %cst_24 [1] : vector<16x16xf32> to vector<16xf32>
    %83 = vector.shape_cast %82 : vector<16xf32> to vector<16x1xf32>
    %84 = tpu.reciprocal %83 {approx = true} : vector<16x1xf32> -> vector<16x1xf32>
    %85 = vector.broadcast %84 : vector<16x1xf32> to vector<16x16xf32>
    %86 = arith.mulf %81, %85 : vector<16x16xf32>
    %87 = arith.truncf %86 : vector<16x16xf32> to vector<16x16xbf16>
    %88 = vector.extract_strided_slice %14 {offsets = [0, 16], sizes = [16, 8], strides = [1, 1]} : vector<16x32xbf16> to vector<16x8xbf16>
    %cst_25 = arith.constant dense<0.000000e+00> : vector<16x8xf32>
    %89 = tpu.matmul %87, %88, %cst_25 {dimension_numbers = #tpu.dot_dimension_numbers<[1], [0], [0], [1], [0, 0, 1, 1], [], []>} : vector<16x16xbf16>, vector<16x8xbf16>, vector<16x8xf32> -> vector<16x8xf32>
    %90 = vector.extract_strided_slice %6 {offsets = [0, 3], sizes = [16, 1], strides = [1, 1]} : vector<16x4xf32> to vector<16x1xf32>
    %91 = vector.extract_strided_slice %10 {offsets = [3, 0], sizes = [1, 16], strides = [1, 1]} : vector<4x16xf32> to vector<1x16xf32>
    %92 = vector.broadcast %90 : vector<16x1xf32> to vector<16x16xf32>
    %93 = vector.broadcast %91 : vector<1x16xf32> to vector<16x16xf32>
    %94 = arith.addf %92, %93 : vector<16x16xf32>
    %cst_26 = arith.constant 0.000000e+00 : f32
    %95 = vector.broadcast %cst_26 : f32 to vector<16x16xf32>
    %96 = arith.cmpf ogt, %94, %95 : vector<16x16xf32>
    %cst_27 = arith.constant 2.000000e-01 : f32
    %97 = vector.broadcast %cst_27 : f32 to vector<16x16xf32>
    %98 = arith.mulf %97, %94 : vector<16x16xf32>
    %99 = arith.select %96, %94, %98 : vector<16x16xi1>, vector<16x16xf32>
    %cst_28 = arith.constant -1.000000e+30 : f32
    %100 = vector.broadcast %cst_28 : f32 to vector<16x16xf32>
    %101 = arith.select %13, %99, %100 : vector<16x16xi1>, vector<16x16xf32>
    %cst_29 = arith.constant dense<0xFF800000> : vector<16xf32>
    %102 = vector.multi_reduction <maximumf>, %101, %cst_29 [1] : vector<16x16xf32> to vector<16xf32>
    %103 = vector.shape_cast %102 : vector<16xf32> to vector<16x1xf32>
    %104 = vector.broadcast %103 : vector<16x1xf32> to vector<16x16xf32>
    %105 = arith.subf %101, %104 : vector<16x16xf32>
    %106 = math.exp %105 : vector<16x16xf32>
    %cst_30 = arith.constant dense<0.000000e+00> : vector<16xf32>
    %107 = vector.multi_reduction <add>, %106, %cst_30 [1] : vector<16x16xf32> to vector<16xf32>
    %108 = vector.shape_cast %107 : vector<16xf32> to vector<16x1xf32>
    %109 = tpu.reciprocal %108 {approx = true} : vector<16x1xf32> -> vector<16x1xf32>
    %110 = vector.broadcast %109 : vector<16x1xf32> to vector<16x16xf32>
    %111 = arith.mulf %106, %110 : vector<16x16xf32>
    %112 = arith.truncf %111 : vector<16x16xf32> to vector<16x16xbf16>
    %113 = vector.extract_strided_slice %14 {offsets = [0, 24], sizes = [16, 8], strides = [1, 1]} : vector<16x32xbf16> to vector<16x8xbf16>
    %cst_31 = arith.constant dense<0.000000e+00> : vector<16x8xf32>
    %114 = tpu.matmul %112, %113, %cst_31 {dimension_numbers = #tpu.dot_dimension_numbers<[1], [0], [0], [1], [0, 0, 1, 1], [], []>} : vector<16x16xbf16>, vector<16x8xbf16>, vector<16x8xf32> -> vector<16x8xf32>
    %115 = tpu.concatenate %39, %64, %89, %114 in 1 : vector<16x8xf32>, vector<16x8xf32>, vector<16x8xf32>, vector<16x8xf32> -> vector<16x32xf32>
    %c0_32 = arith.constant 0 : index
    %c0_33 = arith.constant 0 : index
    %116 = vector.load %arg4[%c0_32, %c0_33] : memref<1x32xf32, #tpu.memory_space<vmem>>, vector<1x32xf32>
    %117 = vector.broadcast %116 : vector<1x32xf32> to vector<16x32xf32>
    %118 = arith.addf %115, %117 : vector<16x32xf32>
    %cst_34 = arith.constant 0.000000e+00 : f32
    %119 = vector.broadcast %cst_34 : f32 to vector<16x32xf32>
    %120 = arith.cmpf ogt, %118, %119 : vector<16x32xf32>
    %121 = math.exp %118 : vector<16x32xf32>
    %cst_35 = arith.constant 1.000000e+00 : f32
    %122 = vector.broadcast %cst_35 : f32 to vector<16x32xf32>
    %123 = arith.subf %121, %122 : vector<16x32xf32>
    %124 = arith.select %120, %118, %123 : vector<16x32xi1>, vector<16x32xf32>
    %c0_36 = arith.constant 0 : index
    %c0_37 = arith.constant 0 : index
    %125 = vector.load %arg5[%c0_36, %c0_37] : memref<16x32xf32, #tpu.memory_space<vmem>>, vector<16x32xf32>
    tpu.vector_store %arg5[%c0_36, %c0_37], %124 {strides = array<i32>} : memref<16x32xf32, #tpu.memory_space<vmem>>, vector<16x32xf32>,
    return
  }
}

</mosaic_0001>

<llo_original>
// kernel: tpu_custom_call.1
$region0: #{tpu_custom_call.1}
  #allocation0 [shape = 'u32[]', space=smem, size = 0x4, offset = 0x4, fixed_abs, tag = 'smem constant byte address 0x4 - core index']
  #allocation1 [shape = 'u32[144,128]{1,0:T(1,128)}', space=vmem, size = 0x12000, scoped, tag = 'internal scratch']
  %s0 = inlined_call_operand.vmem [shape: f32[16,8], index: 0, kind: input, shape index: {}]
  %s1 = inlined_call_operand.vmem [shape: s8[16,16], index: 1, kind: input, shape index: {}]
  %s2 = inlined_call_operand.vmem [shape: f32[8,36], index: 2, kind: input, shape index: {}]
  %s3 = inlined_call_operand.vmem [shape: f32[4,32], index: 3, kind: input, shape index: {}]
  %s4 = inlined_call_operand.vmem [shape: f32[1,32], index: 4, kind: input, shape index: {}]
  %s5 = inlined_call_operand.hbm [shape: f32[16,32], index: 5, kind: output, shape index: {}]
  %s6 = sld [smem:[#allocation0]]
  $region30: #{tpu_custom_call.1} parent=0
    _
  %s8 = ssub.s32 1, %s6
  %s9 = scalar_select 0, %s8, %s6
  $region1: #{tpu_custom_call.1} parent=0
    #allocation2 [shape = 'u8[8192]{0}', space=vmem, size = 0x2000, scoped, tag = 'output window, operand 0, single buffered']
    #allocation3 [shape = 's32[1]{0}', space=sflag, size = 0x4, scoped, tag = 'scoped memory for tpu_custom_call.1']
    %10 = vsyncpa [#allocation3], 0
    // Predicated region
    $region2: #{tpu_custom_call.1} parent=1 // pred_check
      _
    $region3: #{tpu_custom_call.1} parent=1 // pred_check_branch
      %12 = sbr.rel (0) target = $region5
    $region4: #{tpu_custom_call.1} parent=1 // pred_region
      _
    $region5: #{tpu_custom_call.1} parent=1 // pred_fallthru
      _
    // Predicated region
    $region6: #{tpu_custom_call.1} parent=1 // pred_check
      _
    $region7: #{tpu_custom_call.1} parent=1 // pred_check_branch
      %14 = sbr.rel (0) target = $region9
    $region8: #{tpu_custom_call.1} parent=1 // pred_region
      _
    $region9: #{tpu_custom_call.1} parent=1 // pred_fallthru
      _
    // Predicated region
    $region10: #{tpu_custom_call.1} parent=1 // pred_check
      _
    $region11: #{tpu_custom_call.1} parent=1 // pred_check_branch
      %16 = sbr.rel (0) target = $region13
    $region12: #{tpu_custom_call.1} parent=1 // pred_region
      _
    $region13: #{tpu_custom_call.1} parent=1 // pred_fallthru
      _
    // Predicated region
    $region14: #{tpu_custom_call.1} parent=1 // pred_check
      _
    $region15: #{tpu_custom_call.1} parent=1 // pred_check_branch
      %18 = sbr.rel (0) target = $region17
    $region16: #{tpu_custom_call.1} parent=1 // pred_region
      _
    $region17: #{tpu_custom_call.1} parent=1 // pred_fallthru
      _
    // Predicated region
    $region18: #{tpu_custom_call.1} parent=1 // pred_check
      _
    $region19: #{tpu_custom_call.1} parent=1 // pred_check_branch
      %20 = sbr.rel (0) target = $region21
    $region20: #{tpu_custom_call.1} parent=1 // pred_region
      _
    $region21: #{tpu_custom_call.1} parent=1 // pred_fallthru
      _
    %v24 = vld [vmem:[%s0] sm:$0xff]
    %v25 = vld [vmem:[%s0 + $0x8] sm:$0xff]
    %v26 = vpack.c.bf16 %v25, %v24
    %v27 = vld [vmem:[%s2] sm:$0xff]
    %v28 = vpack.c.bf16 %v27, %v27
    %vm29 = vcmask 64512
    %v31 = vsel %vm29, %v26, 0
    %vm33 = vcmask 1043456
    %v35 = vsel %vm33, %v28, 0
    %37 = vmatprep.subr.bf16.mxu0 0
    %38 = vmatpush1.bf16.msra.mxu0 %v35
    %39 = vmatprep.subr.bf16.mxu0 0
    %40 = vmatpush1.bf16.msra.mxu0 0
    %41 = vmatprep.subr.bf16.mxu0 0
    %42 = vmatpush1.bf16.msra.mxu0 0
    %43 = vmatprep.subr.bf16.mxu0 0
    %44 = vmatpush1.bf16.msra.mxu0 0
    %45 = vmatprep.subr.bf16.mxu0 0
    %46 = vmatpush1.bf16.msra.mxu0 0
    %47 = vmatprep.subr.bf16.mxu0 0
    %48 = vmatpush1.bf16.msra.mxu0 0
    %49 = vmatprep.subr.bf16.mxu0 0
    %50 = vmatpush1.bf16.msra.mxu0 0
    %51 = vmatprep.subr.bf16.mxu0 0
    %52 = vmatpush1.bf16.msra.mxu0 0
    %53 = vmatprep.subr.bf16.mxu0 0
    %54 = vmatpush1.bf16.msra.mxu0 0
    %55 = vmatprep.subr.bf16.mxu0 0
    %56 = vmatpush1.bf16.msra.mxu0 0
    %57 = vmatprep.subr.bf16.mxu0 0
    %58 = vmatpush1.bf16.msra.mxu0 0
    %59 = vmatprep.subr.bf16.mxu0 0
    %60 = vmatpush1.bf16.msra.mxu0 0
    %61 = vmatprep.subr.bf16.mxu0 0
    %62 = vmatpush1.bf16.msra.mxu0 0
    %63 = vmatprep.subr.bf16.mxu0 0
    %64 = vmatpush1.bf16.msra.mxu0 0
    %65 = vmatprep.subr.bf16.mxu0 0
    %66 = vmatpush1.bf16.msra.mxu0 0
    %67 = vmatprep.subr.bf16.mxu0 0
    %68 = vmatpush1.bf16.msra.mxu0 0
    %69 = vmatprep.mubr.bf16.mxu0 0
    %70 = vmatmul.mubr.bf16.gmra.mrb[0].mxu0 %v31
    %v71 = vpop.f32.mrb[0].mxu0
    %v72 = vadd.f32 0.0, %v71
    %v73 = vpop.f32.mrb[0].mxu0
    %v74 = vpop.f32.mrb[0].mxu0
    %v75 = vadd.f32 0.0, %v74
    %v76 = vpop.f32.mrb[0].mxu0
    %77 = vdwg.mxu0
    %v78 = vld [vmem:[%s3] sm:$0xf]
    %v79 = vpack.c.bf16 %v78, %v78
    %v80 = vpack.c.bf16 %v75, %v72
    %vm81 = vcmask 261120
    %v83 = vsel %vm81, %v79, 0
    %v86 = vsel %vm81, %v80, 0
    %88 = vmatprep.subr.bf16.mxu0 0
    %89 = vmatpush1.bf16.xpose.msra.mxu0 %v86
    %90 = vmatprep.subr.bf16.mxu0 0
    %91 = vmatpush1.bf16.xpose.msra.mxu0 0
    %92 = vmatprep.subr.bf16.mxu0 0
    %93 = vmatpush1.bf16.xpose.msra.mxu0 0
    %94 = vmatprep.subr.bf16.mxu0 0
    %95 = vmatpush1.bf16.xpose.msra.mxu0 0
    %96 = vmatprep.subr.bf16.mxu0 0
    %97 = vmatpush1.bf16.xpose.msra.mxu0 0
    %98 = vmatprep.subr.bf16.mxu0 0
    %99 = vmatpush1.bf16.xpose.msra.mxu0 0
    %100 = vmatprep.subr.bf16.mxu0 0
    %101 = vmatpush1.bf16.xpose.msra.mxu0 0
    %102 = vmatprep.subr.bf16.mxu0 0
    %103 = vmatpush1.bf16.xpose.msra.mxu0 0
    %104 = vmatprep.subr.bf16.mxu0 0
    %105 = vmatpush1.bf16.xpose.msra.mxu0 0
    %106 = vmatprep.subr.bf16.mxu0 0
    %107 = vmatpush1.bf16.xpose.msra.mxu0 0
    %108 = vmatprep.subr.bf16.mxu0 0
    %109 = vmatpush1.bf16.xpose.msra.mxu0 0
    %110 = vmatprep.subr.bf16.mxu0 0
    %111 = vmatpush1.bf16.xpose.msra.mxu0 0
    %112 = vmatprep.subr.bf16.mxu0 0
    %113 = vmatpush1.bf16.xpose.msra.mxu0 0
    %114 = vmatprep.subr.bf16.mxu0 0
    %115 = vmatpush1.bf16.xpose.msra.mxu0 0
    %116 = vmatprep.subr.bf16.mxu0 0
    %117 = vmatpush1.bf16.xpose.msra.mxu0 0
    %118 = vmatprep.subr.bf16.mxu0 0
    %119 = vmatpush1.bf16.xpose.msra.mxu0 0
    %120 = vmatprep.mubr.bf16.mxu0 0
    %121 = vmatmul.mubr.bf16.gmra.mrb[0].mxu0 %v83
    %v122 = vpop.f32.mrb[0].mxu0
    %v123 = vadd.f32 0.0, %v122
    %v124 = vpop.f32.mrb[0].mxu0
    %v125 = vpop.f32.mrb[0].mxu0
    %v126 = vpop.f32.mrb[0].mxu0
    %127 = vdwg.mxu0
    %v128 = vld [vmem:[%s1] sm:$0x3]
    %v129 = vld [vmem:[%s1 + $0x2] sm:$0x3]
    %vm130 = vnez %v128
    %vm131 = vnez %v129
    %133 = vset.pattern.permute.xlu0 32
    %134 = vperm.xlu0 %133, %v72
    %v135 = vpop.permute.xlu0 %134
    %138 = vset.pattern.permute.xlu0 32
    %139 = vperm.xlu0 %138, %v75
    %v140 = vpop.permute.xlu0 %139
    %v142 = vlaneseq
    %v143 = vshrl.u32 %v142, 7
    %v144 = vsub.s32 0, %v143
    %v145 = vrot.slane %v123, %v144
    %v146 = vadd.f32 %v135, %v145
    %v147 = vadd.f32 %v140, %v145
    %vm148 = vcmp.gt.f32.partialorder %v146, 0.0
    %vm149 = vcmp.gt.f32.partialorder %v147, 0.0
    %v150 = vmul.f32 %v146, 0.2
    %v151 = vmul.f32 %v147, 0.2
    %v152 = vsel %vm148, %v146, %v150
    %v153 = vsel %vm149, %v147, %v151
    %v154 = vsel %vm130, 16843009, 0
    %v155 = vsel %vm131, 16843009, 0
    %v156 = vunpack.c.0.s8 %v154
    %v157 = vunpack.c.0.s8 %v155
    %vm158 = vcmp.ne.s32.totalorder %v156, 0
    %vm159 = vcmp.ne.s32.totalorder %v157, 0
    %v160 = vsel %vm158, %v152, -1e+30
    %v161 = vsel %vm159, %v153, -1e+30
    %vm162 = vcmask 130048
    %v163 = vsel %vm162, %v160, -inf
    %164 = vmax.xlane.f32.xlu0 %v163
    %v165 = vpop.xlane.xlu0 %164
    %v166 = vsel %vm162, %v161, -inf
    %167 = vmax.xlane.f32.xlu0 %v166
    %v168 = vpop.xlane.xlu0 %167
    %v169 = vsub.f32 %v160, %v165
    %v170 = vsub.f32 %v161, %v168
    %v171 = vmul.f32 %v169, 1.442695
    %v172 = vpow.pop %v171
    %v173 = vmul.f32 %v170, 1.442695
    %v174 = vpow.pop %v173
    %v175 = vsel %vm162, %v172, 0.0
    %176 = vadd.xlane.f32.xlu0 %v175
    %v177 = vpop.xlane.xlu0 %176
    %v178 = vsel %vm162, %v174, 0.0
    %179 = vadd.xlane.f32.xlu0 %v178
    %v180 = vpop.xlane.xlu0 %179
    %v181 = vrcp.pop %v177
    %v182 = vrcp.pop %v180
    %v183 = vmul.f32 %v172, %v181
    %v184 = vmul.f32 %v174, %v182
    %v185 = vpack.c.bf16 %v184, %v183
    %v187 = vsel %vm162, %v185, 0
    %189 = vmatprep.subr.bf16.mxu0 0
    %190 = vmatpush1.bf16.msra.mxu0 %v80
    %191 = vmatprep.subr.bf16.mxu0 0
    %192 = vmatpush1.bf16.msra.mxu0 0
    %193 = vmatprep.subr.bf16.mxu0 0
    %194 = vmatpush1.bf16.msra.mxu0 0
    %195 = vmatprep.subr.bf16.mxu0 0
    %196 = vmatpush1.bf16.msra.mxu0 0
    %197 = vmatprep.subr.bf16.mxu0 0
    %198 = vmatpush1.bf16.msra.mxu0 0
    %199 = vmatprep.subr.bf16.mxu0 0
    %200 = vmatpush1.bf16.msra.mxu0 0
    %201 = vmatprep.subr.bf16.mxu0 0
    %202 = vmatpush1.bf16.msra.mxu0 0
    %203 = vmatprep.subr.bf16.mxu0 0
    %204 = vmatpush1.bf16.msra.mxu0 0
    %205 = vmatprep.subr.bf16.mxu0 0
    %206 = vmatpush1.bf16.msra.mxu0 0
    %207 = vmatprep.subr.bf16.mxu0 0
    %208 = vmatpush1.bf16.msra.mxu0 0
    %209 = vmatprep.subr.bf16.mxu0 0
    %210 = vmatpush1.bf16.msra.mxu0 0
    %211 = vmatprep.subr.bf16.mxu0 0
    %212 = vmatpush1.bf16.msra.mxu0 0
    %213 = vmatprep.subr.bf16.mxu0 0
    %214 = vmatpush1.bf16.msra.mxu0 0
    %215 = vmatprep.subr.bf16.mxu0 0
    %216 = vmatpush1.bf16.msra.mxu0 0
    %217 = vmatprep.subr.bf16.mxu0 0
    %218 = vmatpush1.bf16.msra.mxu0 0
    %219 = vmatprep.subr.bf16.mxu0 0
    %220 = vmatpush1.bf16.msra.mxu0 0
    %221 = vmatprep.mubr.bf16.mxu0 0
    %222 = vmatmul.mubr.bf16.gmra.mrb[0].mxu0 %v187
    %v223 = vpop.f32.mrb[0].mxu0
    %v224 = vadd.f32 0.0, %v223
    %v225 = vpop.f32.mrb[0].mxu0
    %v226 = vpop.f32.mrb[0].mxu0
    %v227 = vadd.f32 0.0, %v226
    %v228 = vpop.f32.mrb[0].mxu0
    %229 = vdwg.mxu0
    %230 = vset.pattern.permute.xlu0 33
    %231 = vperm.xlu0 %230, %v72
    %v232 = vpop.permute.xlu0 %231
    %234 = vset.pattern.permute.xlu0 33
    %235 = vperm.xlu0 %234, %v75
    %v236 = vpop.permute.xlu0 %235
    %v238 = vlaneseq
    %v239 = vshrl.u32 %v238, 7
    %v240 = vsub.s32 1, %v239
    %v241 = vrot.slane %v123, %v240
    %v242 = vadd.f32 %v232, %v241
    %v243 = vadd.f32 %v236, %v241
    %vm244 = vcmp.gt.f32.partialorder %v242, 0.0
    %vm245 = vcmp.gt.f32.partialorder %v243, 0.0
    %v246 = vmul.f32 %v242, 0.2
    %v247 = vmul.f32 %v243, 0.2
    %v248 = vsel %vm244, %v242, %v246
    %v249 = vsel %vm245, %v243, %v247
    %v250 = vsel %vm158, %v248, -1e+30
    %v251 = vsel %vm159, %v249, -1e+30
    %v252 = vsel %vm162, %v250, -inf
    %253 = vmax.xlane.f32.xlu0 %v252
    %v254 = vpop.xlane.xlu0 %253
    %v255 = vsel %vm162, %v251, -inf
    %256 = vmax.xlane.f32.xlu0 %v255
    %v257 = vpop.xlane.xlu0 %256
    %v258 = vsub.f32 %v250, %v254
    %v259 = vsub.f32 %v251, %v257
    %v260 = vmul.f32 %v258, 1.442695
    %v261 = vpow.pop %v260
    %v262 = vmul.f32 %v259, 1.442695
    %v263 = vpow.pop %v262
    %v264 = vsel %vm162, %v261, 0.0
    %265 = vadd.xlane.f32.xlu0 %v264
    %v266 = vpop.xlane.xlu0 %265
    %v267 = vsel %vm162, %v263, 0.0
    %268 = vadd.xlane.f32.xlu0 %v267
    %v269 = vpop.xlane.xlu0 %268
    %v270 = vrcp.pop %v266
    %v271 = vrcp.pop %v269
    %v272 = vmul.f32 %v261, %v270
    %v273 = vmul.f32 %v263, %v271
    %v274 = vpack.c.bf16 %v273, %v272
    %276 = vrot.lane.b32.xlu0 %v80, 120
    %v277 = vpop.permute.xlu0 %276
    %v280 = vsel %vm162, %v274, 0
    %282 = vmatprep.subr.bf16.mxu0 0
    %283 = vmatpush1.bf16.msra.mxu0 %v277
    %284 = vmatprep.subr.bf16.mxu0 0
    %285 = vmatpush1.bf16.msra.mxu0 0
    %286 = vmatprep.subr.bf16.mxu0 0
    %287 = vmatpush1.bf16.msra.mxu0 0
    %288 = vmatprep.subr.bf16.mxu0 0
    %289 = vmatpush1.bf16.msra.mxu0 0
    %290 = vmatprep.subr.bf16.mxu0 0
    %291 = vmatpush1.bf16.msra.mxu0 0
    %292 = vmatprep.subr.bf16.mxu0 0
    %293 = vmatpush1.bf16.msra.mxu0 0
    %294 = vmatprep.subr.bf16.mxu0 0
    %295 = vmatpush1.bf16.msra.mxu0 0
    %296 = vmatprep.subr.bf16.mxu0 0
    %297 = vmatpush1.bf16.msra.mxu0 0
    %298 = vmatprep.subr.bf16.mxu0 0
    %299 = vmatpush1.bf16.msra.mxu0 0
    %300 = vmatprep.subr.bf16.mxu0 0
    %301 = vmatpush1.bf16.msra.mxu0 0
    %302 = vmatprep.subr.bf16.mxu0 0
    %303 = vmatpush1.bf16.msra.mxu0 0
    %304 = vmatprep.subr.bf16.mxu0 0
    %305 = vmatpush1.bf16.msra.mxu0 0
    %306 = vmatprep.subr.bf16.mxu0 0
    %307 = vmatpush1.bf16.msra.mxu0 0
    %308 = vmatprep.subr.bf16.mxu0 0
    %309 = vmatpush1.bf16.msra.mxu0 0
    %310 = vmatprep.subr.bf16.mxu0 0
    %311 = vmatpush1.bf16.msra.mxu0 0
    %312 = vmatprep.subr.bf16.mxu0 0
    %313 = vmatpush1.bf16.msra.mxu0 0
    %314 = vmatprep.mubr.bf16.mxu0 0
    %315 = vmatmul.mubr.bf16.gmra.mrb[0].mxu0 %v280
    %v316 = vpop.f32.mrb[0].mxu0
    %v317 = vadd.f32 0.0, %v316
    %v318 = vpop.f32.mrb[0].mxu0
    %v319 = vpop.f32.mrb[0].mxu0
    %v320 = vadd.f32 0.0, %v319
    %v321 = vpop.f32.mrb[0].mxu0
    %322 = vdwg.mxu0
    %323 = vset.pattern.permute.xlu0 34
    %324 = vperm.xlu0 %323, %v72
    %v325 = vpop.permute.xlu0 %324
    %327 = vset.pattern.permute.xlu0 34
    %328 = vperm.xlu0 %327, %v75
    %v329 = vpop.permute.xlu0 %328
    %v331 = vlaneseq
    %v332 = vshrl.u32 %v331, 7
    %v333 = vsub.s32 2, %v332
    %v334 = vrot.slane %v123, %v333
    %v335 = vadd.f32 %v325, %v334
    %v336 = vadd.f32 %v329, %v334
    %vm337 = vcmp.gt.f32.partialorder %v335, 0.0
    %vm338 = vcmp.gt.f32.partialorder %v336, 0.0
    %v339 = vmul.f32 %v335, 0.2
    %v340 = vmul.f32 %v336, 0.2
    %v341 = vsel %vm337, %v335, %v339
    %v342 = vsel %vm338, %v336, %v340
    %v343 = vsel %vm158, %v341, -1e+30
    %v344 = vsel %vm159, %v342, -1e+30
    %v345 = vsel %vm162, %v343, -inf
    %346 = vmax.xlane.f32.xlu0 %v345
    %v347 = vpop.xlane.xlu0 %346
    %v348 = vsel %vm162, %v344, -inf
    %349 = vmax.xlane.f32.xlu0 %v348
    %v350 = vpop.xlane.xlu0 %349
    %v351 = vsub.f32 %v343, %v347
    %v352 = vsub.f32 %v344, %v350
    %v353 = vmul.f32 %v351, 1.442695
    %v354 = vpow.pop %v353
    %v355 = vmul.f32 %v352, 1.442695
    %v356 = vpow.pop %v355
    %v357 = vsel %vm162, %v354, 0.0
    %358 = vadd.xlane.f32.xlu0 %v357
    %v359 = vpop.xlane.xlu0 %358
    %v360 = vsel %vm162, %v356, 0.0
    %361 = vadd.xlane.f32.xlu0 %v360
    %v362 = vpop.xlane.xlu0 %361
    %v363 = vrcp.pop %v359
    %v364 = vrcp.pop %v362
    %v365 = vmul.f32 %v354, %v363
    %v366 = vmul.f32 %v356, %v364
    %v367 = vpack.c.bf16 %v366, %v365
    %368 = vrot.lane.b32.xlu0 %v80, 112
    %v369 = vpop.permute.xlu0 %368
    %v372 = vsel %vm162, %v367, 0
    %374 = vmatprep.subr.bf16.mxu0 0
    %375 = vmatpush1.bf16.msra.mxu0 %v369
    %376 = vmatprep.subr.bf16.mxu0 0
    %377 = vmatpush1.bf16.msra.mxu0 0
    %378 = vmatprep.subr.bf16.mxu0 0
    %379 = vmatpush1.bf16.msra.mxu0 0
    %380 = vmatprep.subr.bf16.mxu0 0
    %381 = vmatpush1.bf16.msra.mxu0 0
    %382 = vmatprep.subr.bf16.mxu0 0
    %383 = vmatpush1.bf16.msra.mxu0 0
    %384 = vmatprep.subr.bf16.mxu0 0
    %385 = vmatpush1.bf16.msra.mxu0 0
    %386 = vmatprep.subr.bf16.mxu0 0
    %387 = vmatpush1.bf16.msra.mxu0 0
    %388 = vmatprep.subr.bf16.mxu0 0
    %389 = vmatpush1.bf16.msra.mxu0 0
    %390 = vmatprep.subr.bf16.mxu0 0
    %391 = vmatpush1.bf16.msra.mxu0 0
    %392 = vmatprep.subr.bf16.mxu0 0
    %393 = vmatpush1.bf16.msra.mxu0 0
    %394 = vmatprep.subr.bf16.mxu0 0
    %395 = vmatpush1.bf16.msra.mxu0 0
    %396 = vmatprep.subr.bf16.mxu0 0
    %397 = vmatpush1.bf16.msra.mxu0 0
    %398 = vmatprep.subr.bf16.mxu0 0
    %399 = vmatpush1.bf16.msra.mxu0 0
    %400 = vmatprep.subr.bf16.mxu0 0
    %401 = vmatpush1.bf16.msra.mxu0 0
    %402 = vmatprep.subr.bf16.mxu0 0
    %403 = vmatpush1.bf16.msra.mxu0 0
    %404 = vmatprep.subr.bf16.mxu0 0
    %405 = vmatpush1.bf16.msra.mxu0 0
    %406 = vmatprep.mubr.bf16.mxu0 0
    %407 = vmatmul.mubr.bf16.gmra.mrb[0].mxu0 %v372
    %v408 = vpop.f32.mrb[0].mxu0
    %v409 = vadd.f32 0.0, %v408
    %v410 = vpop.f32.mrb[0].mxu0
    %v411 = vpop.f32.mrb[0].mxu0
    %v412 = vadd.f32 0.0, %v411
    %v413 = vpop.f32.mrb[0].mxu0
    %414 = vdwg.mxu0
    %415 = vset.pattern.permute.xlu0 35
    %416 = vperm.xlu0 %415, %v72
    %v417 = vpop.permute.xlu0 %416
    %419 = vset.pattern.permute.xlu0 35
    %420 = vperm.xlu0 %419, %v75
    %v421 = vpop.permute.xlu0 %420
    %v423 = vlaneseq
    %v424 = vshrl.u32 %v423, 7
    %v425 = vsub.s32 3, %v424
    %v426 = vrot.slane %v123, %v425
    %v427 = vadd.f32 %v417, %v426
    %v428 = vadd.f32 %v421, %v426
    %vm429 = vcmp.gt.f32.partialorder %v427, 0.0
    %vm430 = vcmp.gt.f32.partialorder %v428, 0.0
    %v431 = vmul.f32 %v427, 0.2
    %v432 = vmul.f32 %v428, 0.2
    %v433 = vsel %vm429, %v427, %v431
    %v434 = vsel %vm430, %v428, %v432
    %v435 = vsel %vm158, %v433, -1e+30
    %v436 = vsel %vm159, %v434, -1e+30
    %v437 = vsel %vm162, %v435, -inf
    %438 = vmax.xlane.f32.xlu0 %v437
    %v439 = vpop.xlane.xlu0 %438
    %v440 = vsel %vm162, %v436, -inf
    %441 = vmax.xlane.f32.xlu0 %v440
    %v442 = vpop.xlane.xlu0 %441
    %v443 = vsub.f32 %v435, %v439
    %v444 = vsub.f32 %v436, %v442
    %v445 = vmul.f32 %v443, 1.442695
    %v446 = vpow.pop %v445
    %v447 = vmul.f32 %v444, 1.442695
    %v448 = vpow.pop %v447
    %v449 = vsel %vm162, %v446, 0.0
    %450 = vadd.xlane.f32.xlu0 %v449
    %v451 = vpop.xlane.xlu0 %450
    %v452 = vsel %vm162, %v448, 0.0
    %453 = vadd.xlane.f32.xlu0 %v452
    %v454 = vpop.xlane.xlu0 %453
    %v455 = vrcp.pop %v451
    %v456 = vrcp.pop %v454
    %v457 = vmul.f32 %v446, %v455
    %v458 = vmul.f32 %v448, %v456
    %v459 = vpack.c.bf16 %v458, %v457
    %460 = vrot.lane.b32.xlu0 %v80, 104
    %v461 = vpop.permute.xlu0 %460
    %v464 = vsel %vm162, %v459, 0
    %466 = vmatprep.subr.bf16.mxu0 0
    %467 = vmatpush1.bf16.msra.mxu0 %v461
    %468 = vmatprep.subr.bf16.mxu0 0
    %469 = vmatpush1.bf16.msra.mxu0 0
    %470 = vmatprep.subr.bf16.mxu0 0
    %471 = vmatpush1.bf16.msra.mxu0 0
    %472 = vmatprep.subr.bf16.mxu0 0
    %473 = vmatpush1.bf16.msra.mxu0 0
    %474 = vmatprep.subr.bf16.mxu0 0
    %475 = vmatpush1.bf16.msra.mxu0 0
    %476 = vmatprep.subr.bf16.mxu0 0
    %477 = vmatpush1.bf16.msra.mxu0 0
    %478 = vmatprep.subr.bf16.mxu0 0
    %479 = vmatpush1.bf16.msra.mxu0 0
    %480 = vmatprep.subr.bf16.mxu0 0
    %481 = vmatpush1.bf16.msra.mxu0 0
    %482 = vmatprep.subr.bf16.mxu0 0
    %483 = vmatpush1.bf16.msra.mxu0 0
    %484 = vmatprep.subr.bf16.mxu0 0
    %485 = vmatpush1.bf16.msra.mxu0 0
    %486 = vmatprep.subr.bf16.mxu0 0
    %487 = vmatpush1.bf16.msra.mxu0 0
    %488 = vmatprep.subr.bf16.mxu0 0
    %489 = vmatpush1.bf16.msra.mxu0 0
    %490 = vmatprep.subr.bf16.mxu0 0
    %491 = vmatpush1.bf16.msra.mxu0 0
    %492 = vmatprep.subr.bf16.mxu0 0
    %493 = vmatpush1.bf16.msra.mxu0 0
    %494 = vmatprep.subr.bf16.mxu0 0
    %495 = vmatpush1.bf16.msra.mxu0 0
    %496 = vmatprep.subr.bf16.mxu0 0
    %497 = vmatpush1.bf16.msra.mxu0 0
    %498 = vmatprep.mubr.bf16.mxu0 0
    %499 = vmatmul.mubr.bf16.gmra.mrb[0].mxu0 %v464
    %v500 = vpop.f32.mrb[0].mxu0
    %v501 = vadd.f32 0.0, %v500
    %v502 = vpop.f32.mrb[0].mxu0
    %v503 = vpop.f32.mrb[0].mxu0
    %v504 = vadd.f32 0.0, %v503
    %v505 = vpop.f32.mrb[0].mxu0
    %506 = vdwg.mxu0
    %509 = vrot.lane.b32.xlu0 %v317, 8
    %v510 = vpop.permute.xlu0 %509
    %511 = vrot.lane.b32.xlu0 %v320, 8
    %v512 = vpop.permute.xlu0 %511
    %517 = vrot.lane.b32.xlu0 %v409, 16
    %v518 = vpop.permute.xlu0 %517
    %519 = vrot.lane.b32.xlu0 %v412, 16
    %v520 = vpop.permute.xlu0 %519
    %525 = vrot.lane.b32.xlu0 %v501, 24
    %v526 = vpop.permute.xlu0 %525
    %527 = vrot.lane.b32.xlu0 %v504, 24
    %v528 = vpop.permute.xlu0 %527
    %v531 = vsel %vm29, %v224, %v510
    %v532 = vsel %vm29, %v227, %v512
    %v533 = vsel %vm162, %v531, %v518
    %v534 = vsel %vm162, %v532, %v520
    %vm535 = vcmask 195584
    %v536 = vsel %vm535, %v533, %v526
    %v537 = vsel %vm535, %v534, %v528
    %v538 = vld [vmem:[%s4] sm:$0x1]
    %v540 = vlaneseq
    %v541 = vshrl.u32 %v540, 7
    %v542 = vsub.s32 0, %v541
    %v543 = vrot.slane %v538, %v542
    %v545 = vadd.f32 %v536, %v543
    %v546 = vadd.f32 %v537, %v543
    %vm547 = vcmp.gt.f32.partialorder %v545, 0.0
    %vm548 = vcmp.gt.f32.partialorder %v546, 0.0
    %v549 = vmul.f32 %v545, 1.442695
    %v550 = vpow.pop %v549
    %v551 = vmul.f32 %v546, 1.442695
    %v552 = vpow.pop %v551
    %v553 = vsub.f32 %v550, 1.0
    %v554 = vsub.f32 %v552, 1.0
    %v555 = vsel %vm547, %v545, %v553
    %v556 = vsel %vm548, %v546, %v554
    %557 = vst.msk [vmem:[#allocation2] sm:$0xff] %vm81, %v555
    %558 = vst.msk [vmem:[#allocation2 + $0x8] sm:$0xff] %vm81, %v556
    // Predicated region
    $region22: #{tpu_custom_call.1} parent=1 // pred_check
      _
    $region23: #{tpu_custom_call.1} parent=1 // pred_check_branch
      %560 = sbr.rel (0) target = $region25
    $region24: #{tpu_custom_call.1} parent=1 // pred_region
      %s562 = ssub.s32 256, 256
      %563 = vsyncadd [#allocation3], %s562
      %s564 = sshll.u32 [#allocation2], 4
      %s565 = int_to_ptr.vmem [resolvable:$true] %s564
      %570 = dma.vmem_to_hbm [thread:$0]  %s565, 256, %s5, [#allocation3], 128, 128, 8
    $region25: #{tpu_custom_call.1} parent=1 // pred_fallthru
      _
    // Predicated region
    $region26: #{tpu_custom_call.1} parent=1 // pred_check
      _
    $region27: #{tpu_custom_call.1} parent=1 // pred_check_branch
      %572 = sbr.rel (0) target = $region29
    $region28: #{tpu_custom_call.1} parent=1 // pred_region
      %573 = dma.done [#allocation3], 256
    $region29: #{tpu_custom_call.1} parent=1 // pred_fallthru
      _
    %574 = vsyncpa [#allocation3], 1

</llo_original>
